<compile_context>
chip_gen: v5e
topology: v5e:2x2
jax: 0.10.0
libtpu: 0.0.40
codegen_flags: <defaults>
</compile_context>

<pallas_src>
import functools
import math

import jax
import jax.numpy as jnp
from jax.experimental import pallas as pl
from jax.experimental.pallas import tpu as pltpu


# ----------------------------- config ---------------------------------------
class Config:
    hidden_size = 32
    layer_norm_eps = 1e-12


def _round_up(x, m):
    return (x + m - 1) // m * m


# ----------------------------- kernel ---------------------------------------
def bert_head_kernel(x_ref, w_ref, p_ref, out_ref, *, valid_h, eps):
    """One M-tile of LayerNorm(gelu(x @ W.T + b)).

    x_ref  : (TILE_M, Hp) bf16 activations (lane-padded hidden dim)
    w_ref  : (Hp, Hp)     bf16 weight in native PyTorch (out_features, in_features) layout
    p_ref  : (3, Hp)      f32  rows = [bias ; gamma ; beta]
    out_ref: (TILE_M, Hp)
    """
    x = x_ref[...]
    w = w_ref[...]
    p = p_ref[...]
    bias, gamma, beta = p[0:1, :], p[1:2, :], p[2:3, :]

    # dense: x @ W.T + b  — contract on W's in_features dim (no transpose);
    # bf16 operands, f32 accumulation on the MXU.
    h = jax.lax.dot_general(
        x, w,
        dimension_numbers=(((1,), (1,)), ((), ())),
        preferred_element_type=jnp.float32,
    ) + bias

    # exact (erf) GELU — matches torch.nn.functional.gelu default.
    h = 0.5 * h * (1.0 + jax.lax.erf(h * (1.0 / math.sqrt(2.0))))

    # LayerNorm over the *valid* hidden columns only (Hp may be lane-padded);
    # biased variance, like torch.nn.LayerNorm.
    lane = jax.lax.broadcasted_iota(jnp.int32, h.shape, 1)
    mask = lane < valid_h
    inv_h = 1.0 / float(valid_h)
    h_masked = jnp.where(mask, h, 0.0)
    mu = jnp.sum(h_masked, axis=-1, keepdims=True) * inv_h
    diff = jnp.where(mask, h - mu, 0.0)
    var = jnp.sum(diff * diff, axis=-1, keepdims=True) * inv_h
    out = diff * jax.lax.rsqrt(var + eps) * gamma + beta

    out_ref[...] = out.astype(out_ref.dtype)


# ----------------------------- wrapper ---------------------------------------
def bert_head(hidden_states, weight, bias, gamma, beta, eps, *, max_tile_m=512):
    """hidden_states: (..., H). weight: (H, H) in PyTorch (out_features, in_features)
    layout. Returns LayerNorm(gelu(hidden_states @ weight.T + bias))."""
    orig_shape = hidden_states.shape
    out_dtype = hidden_states.dtype
    H = orig_shape[-1]
    x2d = hidden_states.reshape(-1, H)            # fold batch+seq into the matmul M dim
    M = x2d.shape[0]

    # ---- tiling: lane-dense hidden dim, sublane-aligned M tiles -------------
    Hp = _round_up(H, 128)
    tile_m = min(max_tile_m, _round_up(M, 8))     # >=512-row tiles at production M
    Mp = _round_up(M, tile_m)
    grid_m = Mp // tile_m

    # ---- pad + cast (pads are no-ops at production H = 768/1024) ------------
    x_pad = jnp.pad(x2d, ((0, Mp - M), (0, Hp - H))).astype(jnp.bfloat16)
    w_pad = jnp.pad(weight, ((0, Hp - H), (0, Hp - H))).astype(jnp.bfloat16)
    params = jnp.pad(
        jnp.stack([bias, gamma, beta]).astype(jnp.float32),
        ((0, 0), (0, Hp - H)),
    )

    # ---- VMEM budget: 2 buffers each for x/out tiles + resident params ------
    out_bytes = jnp.dtype(out_dtype).itemsize
    need = 2 * (tile_m * Hp * 2 + tile_m * Hp * out_bytes + Hp * Hp * 2 + 3 * Hp * 4)
    vmem_limit = int(min(max(3 * need + (8 << 20), 32 << 20), 60 << 20))

    cost = pl.CostEstimate(
        flops=2 * M * H * H,
        transcendentals=2 * M * H,                         # erf + rsqrt
        bytes_accessed=2 * M * H + 2 * H * H + 12 * H + out_bytes * M * H,
    )

    kernel = functools.partial(bert_head_kernel, valid_h=H, eps=float(eps))

    out2d = pl.pallas_call(
        kernel,
        out_shape=jax.ShapeDtypeStruct((Mp, Hp), out_dtype),
        grid=(grid_m,),
        in_specs=[
            pl.BlockSpec((tile_m, Hp), lambda i: (i, 0)),  # activations (pipelined)
            pl.BlockSpec((Hp, Hp), lambda i: (0, 0)),      # weight (VMEM-resident)
            pl.BlockSpec((3, Hp), lambda i: (0, 0)),       # bias / gamma / beta
        ],
        out_specs=pl.BlockSpec((tile_m, Hp), lambda i: (i, 0)),
        compiler_params=pltpu.CompilerParams(
            dimension_semantics=("parallel",),             # megacore sharding on v7x
            vmem_limit_bytes=vmem_limit,
        ),
        cost_estimate=cost,
    )(x_pad, w_pad, params)

    return out2d[:M, :H].reshape(orig_shape)


# ----------------------------- main -------------------------------------------
if __name__ == "__main__":
    config = Config()
    B, S, H = 2, 8, config.hidden_size

    root = jax.random.PRNGKey(0)
    kx, kw, kb = jax.random.split(root, 3)
    hidden_states = jax.random.normal(kx, (B, S, H), jnp.float32)
    # PyTorch nn.Linear stores weight as (out_features, in_features).
    weight = 0.02 * jax.random.normal(kw, (H, H), jnp.float32)
    bias = 0.01 * jax.random.normal(kb, (H,), jnp.float32)
    gamma = jnp.ones((H,), jnp.float32)
    beta = jnp.zeros((H,), jnp.float32)

    out = bert_head(hidden_states, weight, bias, gamma, beta, config.layer_norm_eps)
    out = jax.block_until_ready(out)

    # Pure-JAX reference (matches torch: Linear -> F.gelu (erf) -> LayerNorm).
    def _ref(x, w):
        h = x @ w.T + bias
        h = 0.5 * h * (1.0 + jax.lax.erf(h / math.sqrt(2.0)))
        mu = jnp.mean(h, axis=-1, keepdims=True)
        var = jnp.mean((h - mu) ** 2, axis=-1, keepdims=True)
        return (h - mu) / jnp.sqrt(var + config.layer_norm_eps) * gamma + beta

    # Reference matching the kernel's bf16 MXU feed (tight tolerance) ...
    ref_bf16 = _ref(hidden_states.astype(jnp.bfloat16).astype(jnp.float32),
                    weight.astype(jnp.bfloat16).astype(jnp.float32))
    # ... and the exact f32 torch reference (loose tolerance: bf16 input rounding).
    ref_f32 = _ref(hidden_states, weight)

    assert out.shape == (B, S, H)
    assert bool(jnp.all(jnp.isfinite(out)))
    err_tight = float(jnp.max(jnp.abs(out - ref_bf16)))
    err_loose = float(jnp.max(jnp.abs(out - ref_f32)))
    assert err_tight < 1e-3, f"mismatch vs bf16-matched reference: {err_tight}"
    assert err_loose < 3e-2, f"mismatch vs exact f32 reference: {err_loose}"
    print("KERNEL_OK")
</pallas_src>

<mosaic_0001>
module attributes {stable_mosaic.version = 11 : i64} {
  func.func @bert_head_kernel(%arg0: i32, %arg1: memref<16x128xbf16, #tpu.memory_space<vmem>>, %arg2: memref<128x128xbf16, #tpu.memory_space<vmem>>, %arg3: memref<3x128xf32, #tpu.memory_space<vmem>>, %arg4: memref<16x128xf32, #tpu.memory_space<vmem>>) attributes {dimension_semantics = [#tpu.dimension_semantics<parallel>], iteration_bounds = array<i64: 1>, scalar_prefetch = 0 : i64, scratch_operands = 0 : i64, tpu.core_type = #tpu.core_type<tc>, window_params = [{transform_indices = @transform_0, window_bounds = array<i64: 16, 128>}, {pipeline_mode = #tpu.pipeline_mode<synchronous>, transform_indices = @transform_1, window_bounds = array<i64: 128, 128>}, {pipeline_mode = #tpu.pipeline_mode<synchronous>, transform_indices = @transform_2, window_bounds = array<i64: 3, 128>}, {transform_indices = @transform_3, window_bounds = array<i64: 16, 128>}]} {
    %c0 = arith.constant 0 : index
    %c0_0 = arith.constant 0 : index
    %0 = vector.load %arg1[%c0, %c0_0] : memref<16x128xbf16, #tpu.memory_space<vmem>>, vector<16x128xbf16>
    %c0_1 = arith.constant 0 : index
    %c0_2 = arith.constant 0 : index
    %1 = vector.load %arg2[%c0_1, %c0_2] : memref<128x128xbf16, #tpu.memory_space<vmem>>, vector<128x128xbf16>
    %c0_3 = arith.constant 0 : index
    %c0_4 = arith.constant 0 : index
    %2 = vector.load %arg3[%c0_3, %c0_4] : memref<3x128xf32, #tpu.memory_space<vmem>>, vector<3x128xf32>
    %3 = vector.extract_strided_slice %2 {offsets = [0, 0], sizes = [1, 128], strides = [1, 1]} : vector<3x128xf32> to vector<1x128xf32>
    %4 = vector.extract_strided_slice %2 {offsets = [1, 0], sizes = [1, 128], strides = [1, 1]} : vector<3x128xf32> to vector<1x128xf32>
    %5 = vector.extract_strided_slice %2 {offsets = [2, 0], sizes = [1, 128], strides = [1, 1]} : vector<3x128xf32> to vector<1x128xf32>
    %cst = arith.constant dense<0.000000e+00> : vector<16x128xf32>
    %6 = tpu.matmul %0, %1, %cst {dimension_numbers = #tpu.dot_dimension_numbers<[1], [1], [0], [0], [0, 0, 1, 0], [], []>} : vector<16x128xbf16>, vector<128x128xbf16>, vector<16x128xf32> -> vector<16x128xf32>
    %7 = vector.broadcast %3 : vector<1x128xf32> to vector<16x128xf32>
    %8 = arith.addf %6, %7 : vector<16x128xf32>
    %cst_5 = arith.constant 5.000000e-01 : f32
    %9 = vector.broadcast %cst_5 : f32 to vector<16x128xf32>
    %10 = arith.mulf %9, %8 : vector<16x128xf32>
    %cst_6 = arith.constant 0.707106769 : f32
    %11 = vector.broadcast %cst_6 : f32 to vector<16x128xf32>
    %12 = arith.mulf %8, %11 : vector<16x128xf32>
    %13 = math.erf %12 : vector<16x128xf32>
    %cst_7 = arith.constant 1.000000e+00 : f32
    %14 = vector.broadcast %cst_7 : f32 to vector<16x128xf32>
    %15 = arith.addf %14, %13 : vector<16x128xf32>
    %16 = arith.mulf %10, %15 : vector<16x128xf32>
    %17 = tpu.iota {dimensions = array<i32: 1>} : vector<16x128xi32>
    %c32_i32 = arith.constant 32 : i32
    %18 = vector.broadcast %c32_i32 : i32 to vector<16x128xi32>
    %19 = arith.cmpi slt, %17, %18 : vector<16x128xi32>
    %cst_8 = arith.constant 0.000000e+00 : f32
    %20 = vector.broadcast %cst_8 : f32 to vector<16x128xf32>
    %21 = arith.select %19, %16, %20 : vector<16x128xi1>, vector<16x128xf32>
    %cst_9 = arith.constant dense<0.000000e+00> : vector<16xf32>
    %22 = vector.multi_reduction <add>, %21, %cst_9 [1] : vector<16x128xf32> to vector<16xf32>
    %23 = vector.shape_cast %22 : vector<16xf32> to vector<16x1xf32>
    %cst_10 = arith.constant 3.125000e-02 : f32
    %24 = vector.broadcast %cst_10 : f32 to vector<16x1xf32>
    %25 = arith.mulf %23, %24 : vector<16x1xf32>
    %26 = vector.broadcast %25 : vector<16x1xf32> to vector<16x128xf32>
    %27 = arith.subf %16, %26 : vector<16x128xf32>
    %cst_11 = arith.constant 0.000000e+00 : f32
    %28 = vector.broadcast %cst_11 : f32 to vector<16x128xf32>
    %29 = arith.select %19, %27, %28 : vector<16x128xi1>, vector<16x128xf32>
    %30 = arith.mulf %29, %29 : vector<16x128xf32>
    %cst_12 = arith.constant dense<0.000000e+00> : vector<16xf32>
    %31 = vector.multi_reduction <add>, %30, %cst_12 [1] : vector<16x128xf32> to vector<16xf32>
    %32 = vector.shape_cast %31 : vector<16xf32> to vector<16x1xf32>
    %cst_13 = arith.constant 3.125000e-02 : f32
    %33 = vector.broadcast %cst_13 : f32 to vector<16x1xf32>
    %34 = arith.mulf %32, %33 : vector<16x1xf32>
    %cst_14 = arith.constant 9.99999996E-13 : f32
    %35 = vector.broadcast %cst_14 : f32 to vector<16x1xf32>
    %36 = arith.addf %34, %35 : vector<16x1xf32>
    %37 = math.rsqrt %36 : vector<16x1xf32>
    %38 = vector.broadcast %37 : vector<16x1xf32> to vector<16x128xf32>
    %39 = arith.mulf %29, %38 : vector<16x128xf32>
    %40 = vector.broadcast %4 : vector<1x128xf32> to vector<16x128xf32>
    %41 = arith.mulf %39, %40 : vector<16x128xf32>
    %42 = vector.broadcast %5 : vector<1x128xf32> to vector<16x128xf32>
    %43 = arith.addf %41, %42 : vector<16x128xf32>
    %c0_15 = arith.constant 0 : index
    %c0_16 = arith.constant 0 : index
    %44 = vector.load %arg4[%c0_15, %c0_16] : memref<16x128xf32, #tpu.memory_space<vmem>>, vector<16x128xf32>
    tpu.vector_store %arg4[%c0_15, %c0_16], %43 {strides = array<i32>} : memref<16x128xf32, #tpu.memory_space<vmem>>, vector<16x128xf32>,
    return
  }
  func.func @transform_0(%arg0: i32) -> (i32, i32) {
    %c0_i32 = arith.constant 0 : i32
    %c0_i32_0 = arith.constant 0 : i32
    return %arg0, %c0_i32 : i32, i32
  }
  func.func @transform_1(%arg0: i32) -> (i32, i32) {
    %c0_i32 = arith.constant 0 : i32
    %c0_i32_0 = arith.constant 0 : i32
    %c0_i32_1 = arith.constant 0 : i32
    return %c0_i32, %c0_i32_0 : i32, i32
  }
  func.func @transform_2(%arg0: i32) -> (i32, i32) {
    %c0_i32 = arith.constant 0 : i32
    %c0_i32_0 = arith.constant 0 : i32
    %c0_i32_1 = arith.constant 0 : i32
    return %c0_i32, %c0_i32_0 : i32, i32
  }
  func.func @transform_3(%arg0: i32) -> (i32, i32) {
    %c0_i32 = arith.constant 0 : i32
    %c0_i32_0 = arith.constant 0 : i32
    return %arg0, %c0_i32 : i32, i32
  }
}

</mosaic_0001>

<llo_original>
// kernel: tpu_custom_call.1
$region0: #{tpu_custom_call.1}
  #allocation0 [shape = 'u32[]', space=smem, size = 0x4, offset = 0x4, fixed_abs, tag = 'smem constant byte address 0x4 - core index']
  #allocation1 [shape = 'u32[72,128]{1,0:T(1,128)}', space=vmem, size = 0x9000, scoped, tag = 'internal scratch']
  %s0 = inlined_call_operand.hbm [shape: bf16[16,128], index: 0, kind: input, shape index: {}]
  %s1 = inlined_call_operand.hbm [shape: bf16[128,128], index: 1, kind: input, shape index: {}]
  %s2 = inlined_call_operand.hbm [shape: f32[3,128], index: 2, kind: input, shape index: {}]
  %s3 = inlined_call_operand.hbm [shape: f32[16,128], index: 3, kind: output, shape index: {}]
  %s4 = sld [smem:[#allocation0]]
  $region34: #{tpu_custom_call.1} parent=0
    _
  %s6 = ssub.s32 1, %s4
  %s7 = scalar_select 0, %s6, %s4
  $region1: #{tpu_custom_call.1} parent=0
    #allocation2 [shape = 'u8[4096]{0}', space=vmem, size = 0x1000, scoped, tag = 'input window, operand 0, single buffered']
    #allocation3 [shape = 's32[1]{0}', space=sflag, size = 0x4, scoped, tag = 'scoped memory for tpu_custom_call.1']
    #allocation4 [shape = 's32[1]{0}', space=sflag, size = 0x4, scoped, tag = 'scoped memory for tpu_custom_call.1']
    #allocation5 [shape = 'u8[32768]{0}', space=vmem, size = 0x8000, scoped, tag = 'input window, operand 1, single buffered']
    #allocation6 [shape = 's32[1]{0}', space=sflag, size = 0x4, scoped, tag = 'scoped memory for tpu_custom_call.1']
    #allocation7 [shape = 'u8[2048]{0}', space=vmem, size = 0x800, scoped, tag = 'input window, operand 2, single buffered']
    #allocation8 [shape = 'u8[8192]{0}', space=vmem, size = 0x2000, scoped, tag = 'output window, operand 0, single buffered']
    %8 = vsyncpa [#allocation3], 0
    %9 = vsyncpa [#allocation6], 0
    %10 = vsyncpa [#allocation4], 0
    // Predicated region
    $region2: #{tpu_custom_call.1} parent=1 // pred_check
      _
    $region3: #{tpu_custom_call.1} parent=1 // pred_check_branch
      %12 = sbr.rel (0) target = $region5
    $region4: #{tpu_custom_call.1} parent=1 // pred_region
      %14 = vsyncadd [#allocation3], 0
      %s15 = sshll.u32 %s0, 4
      %s16 = int_to_ptr.hbm [resolvable:$true] %s15
      %s17 = sshll.u32 [#allocation2], 4
      %s18 = int_to_ptr.vmem [resolvable:$true] %s17
      %23 = dma.hbm_to_vmem [thread:$0]  %s16, 128, %s18, [#allocation3], 64, 64, 4
    $region5: #{tpu_custom_call.1} parent=1 // pred_fallthru
      _
    // Predicated region
    $region6: #{tpu_custom_call.1} parent=1 // pred_check
      _
    $region7: #{tpu_custom_call.1} parent=1 // pred_check_branch
      %25 = sbr.rel (0) target = $region9
    $region8: #{tpu_custom_call.1} parent=1 // pred_region
      %27 = vsyncadd [#allocation6], 0
      %s28 = sshll.u32 %s1, 4
      %s29 = int_to_ptr.hbm [resolvable:$true] %s28
      %s30 = sshll.u32 [#allocation5], 4
      %s31 = int_to_ptr.vmem [resolvable:$true] %s30
      %36 = dma.hbm_to_vmem [thread:$0]  %s29, 1024, %s31, [#allocation6], 64, 64, 4
    $region9: #{tpu_custom_call.1} parent=1 // pred_fallthru
      _
    // Predicated region
    $region10: #{tpu_custom_call.1} parent=1 // pred_check
      _
    $region11: #{tpu_custom_call.1} parent=1 // pred_check_branch
      %38 = sbr.rel (0) target = $region13
    $region12: #{tpu_custom_call.1} parent=1 // pred_region
      %40 = vsyncadd [#allocation6], 0
      %s42 = sshll.u32 %s2, 4
      %s43 = int_to_ptr.hbm [resolvable:$true] %s42
      %s44 = sshll.u32 [#allocation7], 4
      %s45 = int_to_ptr.vmem [resolvable:$true] %s44
      %47 = dma.hbm_to_vmem [thread:$0]  %s43, 64, %s45, [#allocation6]
    $region13: #{tpu_custom_call.1} parent=1 // pred_fallthru
      _
    // Predicated region
    $region14: #{tpu_custom_call.1} parent=1 // pred_check
      _
    $region15: #{tpu_custom_call.1} parent=1 // pred_check_branch
      %49 = sbr.rel (0) target = $region17
    $region16: #{tpu_custom_call.1} parent=1 // pred_region
      %51 = dma.done [#allocation3], 128
    $region17: #{tpu_custom_call.1} parent=1 // pred_fallthru
      _
    // Predicated region
    $region18: #{tpu_custom_call.1} parent=1 // pred_check
      _
    $region19: #{tpu_custom_call.1} parent=1 // pred_check_branch
      %53 = sbr.rel (0) target = $region21
    $region20: #{tpu_custom_call.1} parent=1 // pred_region
      %55 = dma.done [#allocation6], 1024
    $region21: #{tpu_custom_call.1} parent=1 // pred_fallthru
      _
    // Predicated region
    $region22: #{tpu_custom_call.1} parent=1 // pred_check
      _
    $region23: #{tpu_custom_call.1} parent=1 // pred_check_branch
      %57 = sbr.rel (0) target = $region25
    $region24: #{tpu_custom_call.1} parent=1 // pred_region
      %59 = dma.done [#allocation6], 64
    $region25: #{tpu_custom_call.1} parent=1 // pred_fallthru
      _
    %v60 = vld [vmem:[#allocation2] sm:$0xf]
    %v61 = vld [vmem:[#allocation2 + $0x4] sm:$0xf]
    %v62 = vld [vmem:[#allocation5] sm:$0xf]
    %v63 = vld [vmem:[#allocation5 + $0x4] sm:$0xf]
    %v64 = vld [vmem:[#allocation5 + $0x8] sm:$0xf]
    %v65 = vld [vmem:[#allocation5 + $0xc] sm:$0xf]
    %v66 = vld [vmem:[#allocation5 + $0x10] sm:$0xf]
    %v67 = vld [vmem:[#allocation5 + $0x14] sm:$0xf]
    %v68 = vld [vmem:[#allocation5 + $0x18] sm:$0xf]
    %v69 = vld [vmem:[#allocation5 + $0x1c] sm:$0xf]
    %v70 = vld [vmem:[#allocation5 + $0x20] sm:$0xf]
    %v71 = vld [vmem:[#allocation5 + $0x24] sm:$0xf]
    %v72 = vld [vmem:[#allocation5 + $0x28] sm:$0xf]
    %v73 = vld [vmem:[#allocation5 + $0x2c] sm:$0xf]
    %v74 = vld [vmem:[#allocation5 + $0x30] sm:$0xf]
    %v75 = vld [vmem:[#allocation5 + $0x34] sm:$0xf]
    %v76 = vld [vmem:[#allocation5 + $0x38] sm:$0xf]
    %v77 = vld [vmem:[#allocation5 + $0x3c] sm:$0xf]
    %v78 = vld [vmem:[#allocation7] sm:$0x7]
    %v79 = vperm.slane %v78, 0
    %v82 = vunpack.c.l.b16 %v60
    %v83 = vunpack.c.l.b16 %v61
    %v84 = vpack.c.b16 %v83, %v82
    %v102 = vunpack.c.l.b16 %v62
    %v103 = vunpack.c.l.b16 %v63
    %v104 = vunpack.c.l.b16 %v64
    %v105 = vunpack.c.l.b16 %v65
    %v106 = vunpack.c.l.b16 %v66
    %v107 = vunpack.c.l.b16 %v67
    %v108 = vunpack.c.l.b16 %v68
    %v109 = vunpack.c.l.b16 %v69
    %v110 = vunpack.c.l.b16 %v70
    %v111 = vunpack.c.l.b16 %v71
    %v112 = vunpack.c.l.b16 %v72
    %v113 = vunpack.c.l.b16 %v73
    %v114 = vunpack.c.l.b16 %v74
    %v115 = vunpack.c.l.b16 %v75
    %v116 = vunpack.c.l.b16 %v76
    %v117 = vunpack.c.l.b16 %v77
    %v118 = vpack.c.b16 %v103, %v102
    %v119 = vpack.c.b16 %v105, %v104
    %v120 = vpack.c.b16 %v107, %v106
    %v121 = vpack.c.b16 %v109, %v108
    %v122 = vpack.c.b16 %v111, %v110
    %v123 = vpack.c.b16 %v113, %v112
    %v124 = vpack.c.b16 %v115, %v114
    %v125 = vpack.c.b16 %v117, %v116
    %134 = vmatpush.bf16.xpose.msra.mxu0 %v125
    %135 = vmatpush.bf16.xpose.msra.mxu0 %v124
    %136 = vmatpush.bf16.xpose.msra.mxu0 %v123
    %137 = vmatpush.bf16.xpose.msra.mxu0 %v122
    %138 = vmatpush.bf16.xpose.msra.mxu0 %v121
    %139 = vmatpush.bf16.xpose.msra.mxu0 %v120
    %140 = vmatpush.bf16.xpose.msra.mxu0 %v119
    %141 = vmatpush.bf16.xpose.msra.mxu0 %v118
    %142 = vmatmul.bf16.gmra.mxu0 %v84
    %v143 = vpop.f32.mrf.mxu0
    %v144 = vadd.f32 %v79, %v143
    %v145 = vpop.f32.mrf.mxu0
    %v146 = vadd.f32 %v79, %v145
    %147 = vdwg.mxu0
    %v148 = vmul.f32 %v144, 0.5
    %v149 = vmul.f32 %v146, 0.5
    %v150 = vmul.f32 %v144, 0.70710677
    %v151 = vmul.f32 %v146, 0.70710677
    %v152 = vmul.f32 %v150, %v150
    %v153 = vmin.f32 16.0, %v152
    %v154 = vmul.f32 %v153, 2.1237322e-06
    %v155 = vadd.f32 %v154, 0.00028619796
    %v156 = vmul.f32 %v153, %v155
    %v157 = vadd.f32 %v156, 0.0036580483
    %v158 = vmul.f32 %v153, %v157
    %v159 = vadd.f32 %v158, 0.05243302
    %v160 = vmul.f32 %v153, %v159
    %v161 = vadd.f32 %v160, 0.18741608
    %v162 = vmul.f32 %v153, %v161
    %v163 = vadd.f32 %v162, 1.1283791
    %v164 = vmul.f32 %v150, %v163
    %v165 = vmul.f32 %v153, 3.8918573e-05
    %v166 = vadd.f32 %v165, 0.001143296
    %v167 = vmul.f32 %v153, %v166
    %v168 = vadd.f32 %v167, 0.014752088
    %v169 = vmul.f32 %v153, %v168
    %v170 = vadd.f32 %v169, 0.112945676
    %v171 = vmul.f32 %v153, %v170
    %v172 = vadd.f32 %v171, 0.4994258
    %v173 = vmul.f32 %v153, %v172
    %v174 = vadd.f32 %v173, 1.0
    %v175 = vrcp.pop %v174
    %v176 = vmul.f32 %v174, %v175
    %v177 = vsub.f32 1.0, %v176
    %v178 = vmul.f32 %v175, %v177
    %v179 = vadd.f32 %v175, %v178
    %vm180 = vweird.f32 %v174
    %vm181 = vweird.f32 %v175
    %vm182 = vmor %vm180, %vm181
    %v183 = vsel %vm182, %v175, %v179
    %v184 = vand.u32 2147483647, %v174
    %vm185 = vcmp.eq.f32.partialorder %v184, 8.507059e+37
    %v186 = vand.u32 %v174, 2147483648
    %v187 = vor.u32 1.1754944e-38, %v186
    %v188 = vsel %vm185, %v187, %v183
    %v189 = vmul.f32 %v164, %v188
    %v190 = vmin.f32 %v189, 1.0
    %v191 = vmax.f32 %v190, -1.0
    %v192 = vmul.f32 %v151, %v151
    %v193 = vmin.f32 16.0, %v192
    %v194 = vmul.f32 %v193, 2.1237322e-06
    %v195 = vadd.f32 %v194, 0.00028619796
    %v196 = vmul.f32 %v193, %v195
    %v197 = vadd.f32 %v196, 0.0036580483
    %v198 = vmul.f32 %v193, %v197
    %v199 = vadd.f32 %v198, 0.05243302
    %v200 = vmul.f32 %v193, %v199
    %v201 = vadd.f32 %v200, 0.18741608
    %v202 = vmul.f32 %v193, %v201
    %v203 = vadd.f32 %v202, 1.1283791
    %v204 = vmul.f32 %v151, %v203
    %v205 = vmul.f32 %v193, 3.8918573e-05
    %v206 = vadd.f32 %v205, 0.001143296
    %v207 = vmul.f32 %v193, %v206
    %v208 = vadd.f32 %v207, 0.014752088
    %v209 = vmul.f32 %v193, %v208
    %v210 = vadd.f32 %v209, 0.112945676
    %v211 = vmul.f32 %v193, %v210
    %v212 = vadd.f32 %v211, 0.4994258
    %v213 = vmul.f32 %v193, %v212
    %v214 = vadd.f32 %v213, 1.0
    %v215 = vrcp.pop %v214
    %v216 = vmul.f32 %v214, %v215
    %v217 = vsub.f32 1.0, %v216
    %v218 = vmul.f32 %v215, %v217
    %v219 = vadd.f32 %v215, %v218
    %vm220 = vweird.f32 %v214
    %vm221 = vweird.f32 %v215
    %vm222 = vmor %vm220, %vm221
    %v223 = vsel %vm222, %v215, %v219
    %v224 = vand.u32 2147483647, %v214
    %vm225 = vcmp.eq.f32.partialorder %v224, 8.507059e+37
    %v226 = vand.u32 %v214, 2147483648
    %v227 = vor.u32 1.1754944e-38, %v226
    %v228 = vsel %vm225, %v227, %v223
    %v229 = vmul.f32 %v204, %v228
    %v230 = vmin.f32 %v229, 1.0
    %v231 = vmax.f32 %v230, -1.0
    %v232 = vadd.f32 %v191, 1.0
    %v233 = vadd.f32 %v231, 1.0
    %v234 = vmul.f32 %v148, %v232
    %v235 = vmul.f32 %v149, %v233
    %v236 = vlaneseq
    %v237 = vand.u32 %v236, 127
    %vm238 = vcmp.lt.s32.totalorder %v237, 32
    %v239 = vsel %vm238, %v234, 0.0
    %v240 = vsel %vm238, %v235, 0.0
    %241 = vadd.xlane.f32.xlu0 %v239
    %v242 = vpop.xlane.xlu0 %241
    %243 = vadd.xlane.f32.xlu0 %v240
    %v244 = vpop.xlane.xlu0 %243
    %v245 = vmul.f32 %v242, 0.03125
    %v246 = vmul.f32 %v244, 0.03125
    %v247 = vsub.f32 %v234, %v245
    %v248 = vsub.f32 %v235, %v246
    %v249 = vsel %vm238, %v247, 0.0
    %v250 = vsel %vm238, %v248, 0.0
    %v251 = vmul.f32 %v249, %v249
    %v252 = vmul.f32 %v250, %v250
    %253 = vadd.xlane.f32.xlu0 %v251
    %v254 = vpop.xlane.xlu0 %253
    %255 = vadd.xlane.f32.xlu0 %v252
    %v256 = vpop.xlane.xlu0 %255
    %v257 = vmul.f32 %v254, 0.03125
    %v258 = vmul.f32 %v256, 0.03125
    %v259 = vadd.f32 %v257, 1e-12
    %v260 = vadd.f32 %v258, 1e-12
    %v261 = vrsqrt.pop %v259
    %v262 = vmul.f32 %v261, %v259
    %v263 = vmul.f32 %v262, %v261
    %v264 = vmul.f32 0.5, %v263
    %v265 = vsub.f32 1.5, %v264
    %v266 = vmul.f32 %v261, %v265
    %vm267 = vweird.f32 %v259
    %vm268 = vweird.f32 %v261
    %vm269 = vmor %vm267, %vm268
    %v270 = vsel %vm269, %v261, %v266
    %v271 = vrsqrt.pop %v260
    %v272 = vmul.f32 %v271, %v260
    %v273 = vmul.f32 %v272, %v271
    %v274 = vmul.f32 0.5, %v273
    %v275 = vsub.f32 1.5, %v274
    %v276 = vmul.f32 %v271, %v275
    %vm277 = vweird.f32 %v260
    %vm278 = vweird.f32 %v271
    %vm279 = vmor %vm277, %vm278
    %v280 = vsel %vm279, %v271, %v276
    %v281 = vmul.f32 %v249, %v270
    %v282 = vmul.f32 %v250, %v280
    %v283 = vperm.slane %v78, 1
    %v284 = vmul.f32 %v281, %v283
    %v285 = vmul.f32 %v282, %v283
    %v286 = vperm.slane %v78, 2
    %v287 = vadd.f32 %v284, %v286
    %v288 = vadd.f32 %v285, %v286
    %289 = vst [vmem:[#allocation8] sm:$0xff] %v287
    %290 = vst [vmem:[#allocation8 + $0x8] sm:$0xff] %v288
    // Predicated region
    $region26: #{tpu_custom_call.1} parent=1 // pred_check
      _
    $region27: #{tpu_custom_call.1} parent=1 // pred_check_branch
      %292 = sbr.rel (0) target = $region29
    $region28: #{tpu_custom_call.1} parent=1 // pred_region
      %294 = vsyncadd [#allocation4], 0
      %s295 = sshll.u32 [#allocation8], 4
      %s296 = int_to_ptr.vmem [resolvable:$true] %s295
      %s297 = sshll.u32 %s3, 4
      %s298 = int_to_ptr.hbm [resolvable:$true] %s297
      %303 = dma.vmem_to_hbm [thread:$0]  %s296, 256, %s298, [#allocation4], 128, 128, 8
    $region29: #{tpu_custom_call.1} parent=1 // pred_fallthru
      _
    // Predicated region
    $region30: #{tpu_custom_call.1} parent=1 // pred_check
      _
    $region31: #{tpu_custom_call.1} parent=1 // pred_check_branch
      %305 = sbr.rel (0) target = $region33
    $region32: #{tpu_custom_call.1} parent=1 // pred_region
      %307 = dma.done [#allocation4], 256
    $region33: #{tpu_custom_call.1} parent=1 // pred_fallthru
      _
    %308 = vsyncpa [#allocation3], 1
    %309 = vsyncpa [#allocation6], 1
    %310 = vsyncpa [#allocation4], 1

</llo_original>
